<compile_context>
chip_gen: v5e
topology: v5e:2x2
jax: 0.10.0
libtpu: 0.0.40
codegen_flags: <defaults>
</compile_context>

<pallas_src>
import jax
import jax.numpy as jnp
from jax.experimental import pallas as pl
from jax.experimental.pallas import tpu as pltpu


def _scale_kernel(w_ref, x_ref, o_ref):
    # Works for both paths:
    #   3-D path: (1, C_blk, L_blk) * (1, C_blk, 1)
    #   2-D path: (B_blk, N_blk)    * (1, N_blk)
    o_ref[...] = (x_ref[...] * w_ref[...]).astype(o_ref.dtype)


def _sublane_align(dtype) -> int:
    # f32 -> 8, bf16/f16 -> 16, int8/fp8 -> 32 (vreg sublane packing)
    return {4: 8, 2: 16, 1: 32}.get(jnp.dtype(dtype).itemsize, 8)


_TARGET_BLOCK_BYTES = 2 * 1024 * 1024   # ~2 MiB of x per block
_VMEM_LIMIT_BYTES = 32 * 1024 * 1024    # safe on v5e/v6e (128 MiB) and v7x (64 MiB)


def weight_forward(x: jax.Array, weight: jax.Array) -> jax.Array:
    """out = x * weight, x: (B, C, L), weight: (C, 1) — torch broadcast semantics."""
    B, C, L = x.shape
    assert weight.shape == (C, 1)
    out_dtype = jnp.result_type(x.dtype, weight.dtype)
    itemsize = jnp.dtype(x.dtype).itemsize
    salign = _sublane_align(x.dtype)

    cost = pl.CostEstimate(
        flops=B * C * L,
        transcendentals=0,
        bytes_accessed=(x.size * itemsize
                        + B * C * L * jnp.dtype(out_dtype).itemsize
                        + weight.size * jnp.dtype(weight.dtype).itemsize),
    )

    if L >= 128:
        # -------- 3-D tiled path (lane dim already >= 128) --------------------
        L_blk = L if L <= 2048 else 2048                              # mult of 128
        max_c = max(salign,
                    (_TARGET_BLOCK_BYTES // (L_blk * itemsize)) // salign * salign)
        C_blk = C if C <= max_c else max_c                            # mult of salign
        grid = (B, pl.cdiv(C, C_blk), pl.cdiv(L, L_blk))

        w3 = weight.reshape(1, C, 1)
        return pl.pallas_call(
            _scale_kernel,
            out_shape=jax.ShapeDtypeStruct((B, C, L), out_dtype),
            grid_spec=pltpu.PrefetchScalarGridSpec(
                num_scalar_prefetch=0,
                grid=grid,
                in_specs=[
                    pl.BlockSpec((1, C_blk, 1), lambda b, ci, li: (0, ci, 0)),
                    pl.BlockSpec((1, C_blk, L_blk), lambda b, ci, li: (b, ci, li)),
                ],
                out_specs=pl.BlockSpec((1, C_blk, L_blk),
                                       lambda b, ci, li: (b, ci, li)),
            ),
            compiler_params=pltpu.CompilerParams(
                dimension_semantics=("parallel", "parallel", "parallel"),
                vmem_limit_bytes=_VMEM_LIMIT_BYTES,
            ),
            cost_estimate=cost,
        )(w3, x)

    # -------- lane-dense path for small L (< 128) -----------------------------
    N = C * L
    x2 = x.reshape(B, N)
    # Pre-expand the per-channel scale once in the wrapper (tiny: N < 128*C elems);
    # flat index c*L + l of w2 equals weight[c], matching x2[b, c*L + l] = x[b, c, l].
    w2 = jnp.repeat(weight.reshape(C), L).reshape(1, N)

    B_blk = B if B <= salign else salign
    max_n = max(128, (_TARGET_BLOCK_BYTES // (B_blk * itemsize)) // 128 * 128)
    N_blk = N if N <= max_n else max_n                                # mult of 128
    grid = (pl.cdiv(B, B_blk), pl.cdiv(N, N_blk))

    out2 = pl.pallas_call(
        _scale_kernel,
        out_shape=jax.ShapeDtypeStruct((B, N), out_dtype),
        grid_spec=pltpu.PrefetchScalarGridSpec(
            num_scalar_prefetch=0,
            grid=grid,
            in_specs=[
                pl.BlockSpec((1, N_blk), lambda bi, ni: (0, ni)),
                pl.BlockSpec((B_blk, N_blk), lambda bi, ni: (bi, ni)),
            ],
            out_specs=pl.BlockSpec((B_blk, N_blk), lambda bi, ni: (bi, ni)),
        ),
        compiler_params=pltpu.CompilerParams(
            dimension_semantics=("parallel", "parallel"),
            vmem_limit_bytes=_VMEM_LIMIT_BYTES,
        ),
        cost_estimate=cost,
    )(w2, x2)
    return out2.reshape(B, C, L)


if __name__ == "__main__":
    key = jax.random.PRNGKey(0)
    k_w, k_x = jax.random.split(key)

    # Module __init__: nn.Parameter(torch.randn(channel, 1))
    channel = 4
    weight = jax.random.normal(k_w, (channel, 1), dtype=jnp.float32)

    # Example input consistent with forward's broadcasting: (B, C, L)
    x = jax.random.normal(k_x, (2, channel, 16), dtype=jnp.float32)

    out = weight_forward(x, weight)
    jax.block_until_ready(out)

    # correctness check against plain JAX broadcasting (same as torch semantics)
    ref = x * weight
    assert out.shape == ref.shape
    assert out.dtype == ref.dtype
    assert jnp.allclose(out, ref, atol=1e-6), "mismatch vs reference"

    print("KERNEL_OK")
</pallas_src>

<mosaic_0001>
module attributes {stable_mosaic.version = 11 : i64} {
  func.func @_scale_kernel(%arg0: i32, %arg1: i32, %arg2: memref<1x64xf32, #tpu.memory_space<vmem>>, %arg3: memref<2x64xf32, #tpu.memory_space<vmem>>, %arg4: memref<2x64xf32, #tpu.memory_space<vmem>>) attributes {dimension_semantics = [#tpu.dimension_semantics<parallel>, #tpu.dimension_semantics<parallel>], iteration_bounds = array<i64: 1, 1>, scalar_prefetch = 0 : i64, scratch_operands = 0 : i64, tpu.core_type = #tpu.core_type<tc>, window_params = [{transform_indices = @transform_0, window_bounds = array<i64: 1, 64>}, {transform_indices = @transform_1, window_bounds = array<i64: 2, 64>}, {transform_indices = @transform_2, window_bounds = array<i64: 2, 64>}]} {
    %c0 = arith.constant 0 : index
    %c0_0 = arith.constant 0 : index
    %0 = vector.load %arg3[%c0, %c0_0] : memref<2x64xf32, #tpu.memory_space<vmem>>, vector<2x64xf32>
    %c0_1 = arith.constant 0 : index
    %c0_2 = arith.constant 0 : index
    %1 = vector.load %arg2[%c0_1, %c0_2] : memref<1x64xf32, #tpu.memory_space<vmem>>, vector<1x64xf32>
    %2 = vector.broadcast %1 : vector<1x64xf32> to vector<2x64xf32>
    %3 = arith.mulf %0, %2 : vector<2x64xf32>
    %c0_3 = arith.constant 0 : index
    %c0_4 = arith.constant 0 : index
    %4 = vector.load %arg4[%c0_3, %c0_4] : memref<2x64xf32, #tpu.memory_space<vmem>>, vector<2x64xf32>
    tpu.vector_store %arg4[%c0_3, %c0_4], %3 {strides = array<i32>} : memref<2x64xf32, #tpu.memory_space<vmem>>, vector<2x64xf32>,
    return
  }
  func.func @transform_0(%arg0: i32, %arg1: i32) -> (i32, i32) {
    %c0_i32 = arith.constant 0 : i32
    %c0_i32_0 = arith.constant 0 : i32
    return %c0_i32, %arg1 : i32, i32
  }
  func.func @transform_1(%arg0: i32, %arg1: i32) -> (i32, i32) {
    %c0_i32 = arith.constant 0 : i32
    return %arg0, %arg1 : i32, i32
  }
  func.func @transform_2(%arg0: i32, %arg1: i32) -> (i32, i32) {
    %c0_i32 = arith.constant 0 : i32
    return %arg0, %arg1 : i32, i32
  }
}

</mosaic_0001>

<llo_original>
// kernel: tpu_custom_call.1
$region0: #{tpu_custom_call.1}
  #allocation0 [shape = 'u32[]', space=smem, size = 0x4, offset = 0x4, fixed_abs, tag = 'smem constant byte address 0x4 - core index']
  #allocation1 [shape = 'u32[72,128]{1,0:T(1,128)}', space=vmem, size = 0x9000, scoped, tag = 'internal scratch']
  %s0 = inlined_call_operand.hbm [shape: f32[1,64], index: 0, kind: input, shape index: {}]
  %s1 = inlined_call_operand.hbm [shape: f32[2,64], index: 1, kind: input, shape index: {}]
  %s2 = inlined_call_operand.hbm [shape: f32[2,64], index: 2, kind: output, shape index: {}]
  %s3 = sld [smem:[#allocation0]]
  $region26: #{tpu_custom_call.1} parent=0
    _
  %s5 = ssub.s32 1, %s3
  %s6 = scalar_select 0, %s5, %s3
  $region1: #{tpu_custom_call.1} parent=0
    #allocation2 [shape = 'u8[512]{0}', space=vmem, size = 0x400, scoped, tag = 'input window, operand 0, single buffered']
    #allocation3 [shape = 's32[1]{0}', space=sflag, size = 0x4, scoped, tag = 'scoped memory for tpu_custom_call.1']
    #allocation4 [shape = 's32[1]{0}', space=sflag, size = 0x4, scoped, tag = 'scoped memory for tpu_custom_call.1']
    #allocation5 [shape = 'u8[1024]{0}', space=vmem, size = 0x400, scoped, tag = 'input window, operand 1, single buffered']
    #allocation6 [shape = 's32[1]{0}', space=sflag, size = 0x4, scoped, tag = 'scoped memory for tpu_custom_call.1']
    #allocation7 [shape = 'u8[1024]{0}', space=vmem, size = 0x400, scoped, tag = 'output window, operand 0, single buffered']
    %7 = vsyncpa [#allocation3], 0
    %8 = vsyncpa [#allocation6], 0
    %9 = vsyncpa [#allocation4], 0
    // Predicated region
    $region2: #{tpu_custom_call.1} parent=1 // pred_check
      _
    $region3: #{tpu_custom_call.1} parent=1 // pred_check_branch
      %11 = sbr.rel (0) target = $region5
    $region4: #{tpu_custom_call.1} parent=1 // pred_region
      %13 = vsyncadd [#allocation3], 0
      %s15 = sshll.u32 %s0, 4
      %s16 = int_to_ptr.hbm [resolvable:$true] %s15
      %s17 = sshll.u32 [#allocation2], 4
      %s18 = int_to_ptr.vmem [resolvable:$true] %s17
      %20 = dma.hbm_to_vmem [thread:$0]  %s16, 16, %s18, [#allocation3]
    $region5: #{tpu_custom_call.1} parent=1 // pred_fallthru
      _
    // Predicated region
    $region6: #{tpu_custom_call.1} parent=1 // pred_check
      _
    $region7: #{tpu_custom_call.1} parent=1 // pred_check_branch
      %22 = sbr.rel (0) target = $region9
    $region8: #{tpu_custom_call.1} parent=1 // pred_region
      %24 = vsyncadd [#allocation6], 0
      %s26 = sshll.u32 %s1, 4
      %s27 = int_to_ptr.hbm [resolvable:$true] %s26
      %s28 = sshll.u32 [#allocation5], 4
      %s29 = int_to_ptr.vmem [resolvable:$true] %s28
      %31 = dma.hbm_to_vmem [thread:$0]  %s27, 32, %s29, [#allocation6]
    $region9: #{tpu_custom_call.1} parent=1 // pred_fallthru
      _
    // Predicated region
    $region10: #{tpu_custom_call.1} parent=1 // pred_check
      _
    $region11: #{tpu_custom_call.1} parent=1 // pred_check_branch
      %33 = sbr.rel (0) target = $region13
    $region12: #{tpu_custom_call.1} parent=1 // pred_region
      %35 = dma.done [#allocation3], 16
    $region13: #{tpu_custom_call.1} parent=1 // pred_fallthru
      _
    // Predicated region
    $region14: #{tpu_custom_call.1} parent=1 // pred_check
      _
    $region15: #{tpu_custom_call.1} parent=1 // pred_check_branch
      %37 = sbr.rel (0) target = $region17
    $region16: #{tpu_custom_call.1} parent=1 // pred_region
      %39 = dma.done [#allocation6], 32
    $region17: #{tpu_custom_call.1} parent=1 // pred_fallthru
      _
    %v40 = vld [vmem:[#allocation5] sm:$0x3]
    %v41 = vld [vmem:[#allocation2] sm:$0x1]
    %v43 = vperm.slane %v41, 0
    %v45 = vmul.f32 %v40, %v43
    %vm46 = vcmask 517120
    %47 = vst.msk [vmem:[#allocation7] sm:$0x3] %vm46, %v45
    // Predicated region
    $region18: #{tpu_custom_call.1} parent=1 // pred_check
      _
    $region19: #{tpu_custom_call.1} parent=1 // pred_check_branch
      %49 = sbr.rel (0) target = $region21
    $region20: #{tpu_custom_call.1} parent=1 // pred_region
      %51 = vsyncadd [#allocation4], 0
      %s53 = sshll.u32 [#allocation7], 4
      %s54 = int_to_ptr.vmem [resolvable:$true] %s53
      %s55 = sshll.u32 %s2, 4
      %s56 = int_to_ptr.hbm [resolvable:$true] %s55
      %58 = dma.vmem_to_hbm [thread:$0]  %s54, 32, %s56, [#allocation4]
    $region21: #{tpu_custom_call.1} parent=1 // pred_fallthru
      _
    // Predicated region
    $region22: #{tpu_custom_call.1} parent=1 // pred_check
      _
    $region23: #{tpu_custom_call.1} parent=1 // pred_check_branch
      %60 = sbr.rel (0) target = $region25
    $region24: #{tpu_custom_call.1} parent=1 // pred_region
      %62 = dma.done [#allocation4], 32
    $region25: #{tpu_custom_call.1} parent=1 // pred_fallthru
      _
    %63 = vsyncpa [#allocation3], 1
    %64 = vsyncpa [#allocation6], 1
    %65 = vsyncpa [#allocation4], 1

</llo_original>
